<compile_context>
chip_gen: v7x
topology: tpu7x:2x2x1
jax: 0.10.0
libtpu: 0.0.40
codegen_flags: <defaults>
</compile_context>

<pallas_src>
import math
from typing import Sequence, Union

import jax
import jax.numpy as jnp
from jax.experimental import pallas as pl
from jax.experimental.pallas import tpu as pltpu

BN_EPS = 1e-5
_LANE = 128
_SUBLANE = 8


def _round_up(n: int, m: int) -> int:
    return ((n + m - 1) // m) * m


def _make_mlp_kernel(num_linear: int):
    """Kernel for a fixed (trace-time) number of Linear layers on one batch tile."""

    def kernel(*refs):
        # refs = [x_tile] + [w_i, b_i] * num_linear + [out_tile]
        x_ref = refs[0]
        out_ref = refs[-1]
        act_dtype = x_ref.dtype

        x = x_ref[...]
        idx = 1
        for layer in range(num_linear):
            w = refs[idx][...]          # (in, out) — native dtype, straight to MXU
            b = refs[idx + 1][...]      # (1, out)
            idx += 2
            y = jnp.dot(x, w, preferred_element_type=jnp.float32)
            y = y + b.astype(jnp.float32)
            if layer < num_linear - 1:  # ReLU on all but the last Linear
                y = jnp.maximum(y, 0.0)
                x = y.astype(act_dtype)  # carry activations narrow (bf16 if inputs are bf16)
            else:
                x = y
        out_ref[...] = x.astype(out_ref.dtype)

    return kernel


def init_simple_mlp_params(key,
                           input_dim: int,
                           hidden_dim: Union[Sequence[int], int],
                           output_dim: int = 1,
                           require_batch_norm: bool = False,
                           dtype=jnp.float32):
    """Deterministic init mirroring nn.Linear's U(-1/sqrt(fan_in), 1/sqrt(fan_in))."""
    if isinstance(hidden_dim, int):
        hidden_dim = [hidden_dim]
    dims = [input_dim] + list(hidden_dim) + [output_dim]

    params = {"weights": [], "biases": []}
    for fan_in, fan_out in zip(dims[:-1], dims[1:]):
        key, kw, kb = jax.random.split(key, 3)
        bound = 1.0 / jnp.sqrt(jnp.asarray(fan_in, dtype=jnp.float32))
        # stored already transposed: (in, out) so the kernel does x @ W + b
        w = jax.random.uniform(kw, (fan_in, fan_out), dtype, -bound, bound)
        b = jax.random.uniform(kb, (1, fan_out), dtype, -bound, bound)
        params["weights"].append(w)
        params["biases"].append(b)

    if require_batch_norm:
        params["gamma"] = jnp.ones((1, input_dim), dtype)
        params["beta"] = jnp.zeros((1, input_dim), dtype)
    return params


def simple_mlp_forward(x, params, require_batch_norm: bool = False, batch_tile: int = None):
    """SimpleMLP forward; Linear->ReLU chain runs as one batch-tiled Pallas kernel."""
    weights = list(params["weights"])
    biases = list(params["biases"])
    num_linear = len(weights)
    batch, in_dim = x.shape
    out_dim = weights[-1].shape[1]

    # ---- BatchNorm1d (train-mode batch stats over the FULL batch), folded into
    #      the first Linear so per-tile execution stays exact.
    if require_batch_norm:
        xf = x.astype(jnp.float32)
        mean = jnp.mean(xf, axis=0, keepdims=True)
        var = jnp.mean((xf - mean) ** 2, axis=0, keepdims=True)          # biased variance
        scale = params["gamma"].astype(jnp.float32) * jax.lax.rsqrt(var + BN_EPS)  # (1, D)
        shift = params["beta"].astype(jnp.float32) - mean * scale                  # (1, D)
        w0 = weights[0].astype(jnp.float32)
        b0 = biases[0].astype(jnp.float32)
        weights[0] = (w0 * scale.reshape(-1, 1)).astype(weights[0].dtype)
        biases[0] = (b0 + shift @ w0).astype(biases[0].dtype)
        # TODO(synk): BatchNorm1d running_mean/running_var buffer updates (training
        # side effects) are not modeled; forward output is unaffected.

    # ---- Lane-dense output: pad last layer out-dim to a multiple of 128 lanes.
    out_pad = _round_up(out_dim, _LANE)
    if out_pad != out_dim:
        weights[-1] = jnp.pad(weights[-1], ((0, 0), (0, out_pad - out_dim)))
        biases[-1] = jnp.pad(biases[-1], ((0, 0), (0, out_pad - out_dim)))

    # ---- Batch tiling (multiple of 8 sublanes; pad batch so the grid is exact).
    if batch_tile is None:
        batch_tile = min(batch, 512)
    tb = max(_SUBLANE, _round_up(min(batch_tile, batch), _SUBLANE))
    padded_batch = _round_up(batch, tb)
    if padded_batch != batch:
        x = jnp.pad(x, ((0, padded_batch - batch), (0, 0)))
    grid = (padded_batch // tb,)

    # ---- BlockSpecs: activation/output tiles walk the batch; weights stay resident.
    in_specs = [pl.BlockSpec((tb, in_dim), lambda i: (i, 0))]
    inputs = [x]
    for w, b in zip(weights, biases):
        in_specs.append(pl.BlockSpec(w.shape, lambda i: (0, 0)))
        in_specs.append(pl.BlockSpec(b.shape, lambda i: (0, 0)))
        inputs += [w, b]
    out_specs = pl.BlockSpec((tb, out_pad), lambda i: (i, 0))

    # ---- VMEM budget: resident params + double-buffered x/out tiles + live activations.
    itemsize = jnp.dtype(x.dtype).itemsize
    param_bytes = sum(math.prod(a.shape) * a.dtype.itemsize for a in weights + biases)
    max_width = max([in_dim, out_pad] + [w.shape[1] for w in weights])
    tile_bytes = 2 * tb * (in_dim + out_pad) * itemsize     # double-buffered in/out tiles
    act_bytes = 2 * tb * max_width * 4                      # f32 accumulator + carried act
    est = param_bytes + tile_bytes + act_bytes
    vmem_limit = int(min(max(32 * 1024 * 1024, 2 * est), 64 * 1024 * 1024))

    kernel = _make_mlp_kernel(num_linear)
    out = pl.pallas_call(
        kernel,
        out_shape=jax.ShapeDtypeStruct((padded_batch, out_pad), x.dtype),
        grid=grid,
        in_specs=in_specs,
        out_specs=out_specs,
        compiler_params=pltpu.CompilerParams(
            dimension_semantics=("parallel",),   # megacore / 2-TC sharding on v7x
            vmem_limit_bytes=vmem_limit,
        ),
    )(*inputs)
    return out[:batch, :out_dim]


def _reference_forward(x, params, require_batch_norm):
    x = x.astype(jnp.float32)
    if require_batch_norm:
        mean = jnp.mean(x, axis=0, keepdims=True)
        var = jnp.mean((x - mean) ** 2, axis=0, keepdims=True)
        x = (x - mean) / jnp.sqrt(var + BN_EPS)
        x = x * params["gamma"] + params["beta"]
    n = len(params["weights"])
    for i, (w, b) in enumerate(zip(params["weights"], params["biases"])):
        x = x @ w + b
        if i < n - 1:
            x = jnp.maximum(x, 0.0)
    return x


if __name__ == "__main__":
    key = jax.random.PRNGKey(0)
    k_x, k_p = jax.random.split(key)

    # Shapes consistent with SimpleMLP(input_dim=32, hidden_dim=[64, 32],
    # output_dim=1, require_batch_norm=True); x is (batch, input_dim).
    batch, input_dim, hidden_dim, output_dim = 8, 32, [64, 32], 1
    require_batch_norm = True

    x = jax.random.normal(k_x, (batch, input_dim), jnp.float32)
    params = init_simple_mlp_params(k_p, input_dim, hidden_dim, output_dim,
                                    require_batch_norm)

    out = simple_mlp_forward(x, params, require_batch_norm)
    out = jax.block_until_ready(out)

    ref = _reference_forward(x, params, require_batch_norm)
    assert out.shape == (batch, output_dim)
    assert jnp.allclose(out, ref, atol=1e-4, rtol=1e-4)

    print("KERNEL_OK")
</pallas_src>

<mosaic_0001>
module attributes {stable_mosaic.version = 11 : i64} {
  func.func @kernel(%arg0: i32, %arg1: memref<8x32xf32, #tpu.memory_space<vmem>>, %arg2: memref<32x64xf32, #tpu.memory_space<vmem>>, %arg3: memref<1x64xf32, #tpu.memory_space<vmem>>, %arg4: memref<64x32xf32, #tpu.memory_space<vmem>>, %arg5: memref<1x32xf32, #tpu.memory_space<vmem>>, %arg6: memref<32x128xf32, #tpu.memory_space<vmem>>, %arg7: memref<1x128xf32, #tpu.memory_space<vmem>>, %arg8: memref<8x128xf32, #tpu.memory_space<vmem>>) attributes {dimension_semantics = [#tpu.dimension_semantics<parallel>], iteration_bounds = array<i64: 1>, scalar_prefetch = 0 : i64, scratch_operands = 0 : i64, tpu.core_type = #tpu.core_type<tc>, window_params = [{transform_indices = @transform_0, window_bounds = array<i64: 8, 32>}, {pipeline_mode = #tpu.pipeline_mode<synchronous>, transform_indices = @transform_1, window_bounds = array<i64: 32, 64>}, {pipeline_mode = #tpu.pipeline_mode<synchronous>, transform_indices = @transform_2, window_bounds = array<i64: 1, 64>}, {pipeline_mode = #tpu.pipeline_mode<synchronous>, transform_indices = @transform_3, window_bounds = array<i64: 64, 32>}, {pipeline_mode = #tpu.pipeline_mode<synchronous>, transform_indices = @transform_4, window_bounds = array<i64: 1, 32>}, {pipeline_mode = #tpu.pipeline_mode<synchronous>, transform_indices = @transform_5, window_bounds = array<i64: 32, 128>}, {pipeline_mode = #tpu.pipeline_mode<synchronous>, transform_indices = @transform_6, window_bounds = array<i64: 1, 128>}, {transform_indices = @transform_7, window_bounds = array<i64: 8, 128>}]} {
    %c0 = arith.constant 0 : index
    %c0_0 = arith.constant 0 : index
    %0 = vector.load %arg1[%c0, %c0_0] : memref<8x32xf32, #tpu.memory_space<vmem>>, vector<8x32xf32>
    %c0_1 = arith.constant 0 : index
    %c0_2 = arith.constant 0 : index
    %1 = vector.load %arg2[%c0_1, %c0_2] : memref<32x64xf32, #tpu.memory_space<vmem>>, vector<32x64xf32>
    %c0_3 = arith.constant 0 : index
    %c0_4 = arith.constant 0 : index
    %2 = vector.load %arg3[%c0_3, %c0_4] : memref<1x64xf32, #tpu.memory_space<vmem>>, vector<1x64xf32>
    %cst = arith.constant dense<0.000000e+00> : vector<8x64xf32>
    %3 = tpu.matmul %0, %1, %cst {dimension_numbers = #tpu.dot_dimension_numbers<[1], [0], [0], [1], [0, 0, 1, 1], [], []>} : vector<8x32xf32>, vector<32x64xf32>, vector<8x64xf32> -> vector<8x64xf32>
    %4 = vector.broadcast %2 : vector<1x64xf32> to vector<8x64xf32>
    %5 = arith.addf %3, %4 : vector<8x64xf32>
    %cst_5 = arith.constant 0.000000e+00 : f32
    %6 = vector.broadcast %cst_5 : f32 to vector<8x64xf32>
    %7 = arith.maximumf %5, %6 : vector<8x64xf32>
    %c0_6 = arith.constant 0 : index
    %c0_7 = arith.constant 0 : index
    %8 = vector.load %arg4[%c0_6, %c0_7] : memref<64x32xf32, #tpu.memory_space<vmem>>, vector<64x32xf32>
    %c0_8 = arith.constant 0 : index
    %c0_9 = arith.constant 0 : index
    %9 = vector.load %arg5[%c0_8, %c0_9] : memref<1x32xf32, #tpu.memory_space<vmem>>, vector<1x32xf32>
    %cst_10 = arith.constant dense<0.000000e+00> : vector<8x32xf32>
    %10 = tpu.matmul %7, %8, %cst_10 {dimension_numbers = #tpu.dot_dimension_numbers<[1], [0], [0], [1], [0, 0, 1, 1], [], []>} : vector<8x64xf32>, vector<64x32xf32>, vector<8x32xf32> -> vector<8x32xf32>
    %11 = vector.broadcast %9 : vector<1x32xf32> to vector<8x32xf32>
    %12 = arith.addf %10, %11 : vector<8x32xf32>
    %cst_11 = arith.constant 0.000000e+00 : f32
    %13 = vector.broadcast %cst_11 : f32 to vector<8x32xf32>
    %14 = arith.maximumf %12, %13 : vector<8x32xf32>
    %c0_12 = arith.constant 0 : index
    %c0_13 = arith.constant 0 : index
    %15 = vector.load %arg6[%c0_12, %c0_13] : memref<32x128xf32, #tpu.memory_space<vmem>>, vector<32x128xf32>
    %c0_14 = arith.constant 0 : index
    %c0_15 = arith.constant 0 : index
    %16 = vector.load %arg7[%c0_14, %c0_15] : memref<1x128xf32, #tpu.memory_space<vmem>>, vector<1x128xf32>
    %cst_16 = arith.constant dense<0.000000e+00> : vector<8x128xf32>
    %17 = tpu.matmul %14, %15, %cst_16 {dimension_numbers = #tpu.dot_dimension_numbers<[1], [0], [0], [1], [0, 0, 1, 1], [], []>} : vector<8x32xf32>, vector<32x128xf32>, vector<8x128xf32> -> vector<8x128xf32>
    %18 = vector.broadcast %16 : vector<1x128xf32> to vector<8x128xf32>
    %19 = arith.addf %17, %18 : vector<8x128xf32>
    %c0_17 = arith.constant 0 : index
    %c0_18 = arith.constant 0 : index
    %20 = vector.load %arg8[%c0_17, %c0_18] : memref<8x128xf32, #tpu.memory_space<vmem>>, vector<8x128xf32>
    tpu.vector_store %arg8[%c0_17, %c0_18], %19 {strides = array<i32>} : memref<8x128xf32, #tpu.memory_space<vmem>>, vector<8x128xf32>,
    return
  }
  func.func @transform_0(%arg0: i32) -> (i32, i32) {
    %c0_i32 = arith.constant 0 : i32
    %c0_i32_0 = arith.constant 0 : i32
    return %arg0, %c0_i32 : i32, i32
  }
  func.func @transform_1(%arg0: i32) -> (i32, i32) {
    %c0_i32 = arith.constant 0 : i32
    %c0_i32_0 = arith.constant 0 : i32
    %c0_i32_1 = arith.constant 0 : i32
    return %c0_i32, %c0_i32_0 : i32, i32
  }
  func.func @transform_2(%arg0: i32) -> (i32, i32) {
    %c0_i32 = arith.constant 0 : i32
    %c0_i32_0 = arith.constant 0 : i32
    %c0_i32_1 = arith.constant 0 : i32
    return %c0_i32, %c0_i32_0 : i32, i32
  }
  func.func @transform_3(%arg0: i32) -> (i32, i32) {
    %c0_i32 = arith.constant 0 : i32
    %c0_i32_0 = arith.constant 0 : i32
    %c0_i32_1 = arith.constant 0 : i32
    return %c0_i32, %c0_i32_0 : i32, i32
  }
  func.func @transform_4(%arg0: i32) -> (i32, i32) {
    %c0_i32 = arith.constant 0 : i32
    %c0_i32_0 = arith.constant 0 : i32
    %c0_i32_1 = arith.constant 0 : i32
    return %c0_i32, %c0_i32_0 : i32, i32
  }
  func.func @transform_5(%arg0: i32) -> (i32, i32) {
    %c0_i32 = arith.constant 0 : i32
    %c0_i32_0 = arith.constant 0 : i32
    %c0_i32_1 = arith.constant 0 : i32
    return %c0_i32, %c0_i32_0 : i32, i32
  }
  func.func @transform_6(%arg0: i32) -> (i32, i32) {
    %c0_i32 = arith.constant 0 : i32
    %c0_i32_0 = arith.constant 0 : i32
    %c0_i32_1 = arith.constant 0 : i32
    return %c0_i32, %c0_i32_0 : i32, i32
  }
  func.func @transform_7(%arg0: i32) -> (i32, i32) {
    %c0_i32 = arith.constant 0 : i32
    %c0_i32_0 = arith.constant 0 : i32
    return %arg0, %c0_i32 : i32, i32
  }
}

</mosaic_0001>

<llo_original>
// kernel: tpu_custom_call.1
$region0: #{tpu_custom_call.1}
  #allocation0 [shape = 'u32[]', space=smem, size = 0x4, offset = 0x4, fixed_abs, tag = 'smem constant byte address 0x4 - core index']
  #allocation1 [shape = 'u32[144,128]{1,0:T(1,128)}', space=vmem, size = 0x12000, scoped, tag = 'internal scratch']
  %s0 = inlined_call_operand.vmem [shape: f32[8,32], index: 0, kind: input, shape index: {}]
  %s1 = inlined_call_operand.vmem [shape: f32[32,64], index: 1, kind: input, shape index: {}]
  %s2 = inlined_call_operand.vmem [shape: f32[1,64], index: 2, kind: input, shape index: {}]
  %s3 = inlined_call_operand.vmem [shape: f32[64,32], index: 3, kind: input, shape index: {}]
  %s4 = inlined_call_operand.vmem [shape: f32[1,32], index: 4, kind: input, shape index: {}]
  %s5 = inlined_call_operand.vmem [shape: f32[32,128], index: 5, kind: input, shape index: {}]
  %s6 = inlined_call_operand.vmem [shape: f32[1,128], index: 6, kind: input, shape index: {}]
  %s7 = inlined_call_operand.hbm [shape: f32[8,128], index: 7, kind: output, shape index: {}]
  %s8 = sld [smem:[#allocation0]]
  $region38: #{tpu_custom_call.1} parent=0
    _
  %s10 = ssub.s32 1, %s8
  %s11 = scalar_select 0, %s10, %s8
  $region1: #{tpu_custom_call.1} parent=0
    #allocation2 [shape = 'u8[4096]{0}', space=vmem, size = 0x1000, scoped, tag = 'output window, operand 0, single buffered']
    #allocation3 [shape = 's32[1]{0}', space=sflag, size = 0x4, scoped, tag = 'scoped memory for tpu_custom_call.1']
    %12 = vsyncpa [#allocation3], 0
    // Predicated region
    $region2: #{tpu_custom_call.1} parent=1 // pred_check
      _
    $region3: #{tpu_custom_call.1} parent=1 // pred_check_branch
      %14 = sbr.rel (0) target = $region5
    $region4: #{tpu_custom_call.1} parent=1 // pred_region
      _
    $region5: #{tpu_custom_call.1} parent=1 // pred_fallthru
      _
    // Predicated region
    $region6: #{tpu_custom_call.1} parent=1 // pred_check
      _
    $region7: #{tpu_custom_call.1} parent=1 // pred_check_branch
      %16 = sbr.rel (0) target = $region9
    $region8: #{tpu_custom_call.1} parent=1 // pred_region
      _
    $region9: #{tpu_custom_call.1} parent=1 // pred_fallthru
      _
    // Predicated region
    $region10: #{tpu_custom_call.1} parent=1 // pred_check
      _
    $region11: #{tpu_custom_call.1} parent=1 // pred_check_branch
      %18 = sbr.rel (0) target = $region13
    $region12: #{tpu_custom_call.1} parent=1 // pred_region
      _
    $region13: #{tpu_custom_call.1} parent=1 // pred_fallthru
      _
    // Predicated region
    $region14: #{tpu_custom_call.1} parent=1 // pred_check
      _
    $region15: #{tpu_custom_call.1} parent=1 // pred_check_branch
      %20 = sbr.rel (0) target = $region17
    $region16: #{tpu_custom_call.1} parent=1 // pred_region
      _
    $region17: #{tpu_custom_call.1} parent=1 // pred_fallthru
      _
    // Predicated region
    $region18: #{tpu_custom_call.1} parent=1 // pred_check
      _
    $region19: #{tpu_custom_call.1} parent=1 // pred_check_branch
      %22 = sbr.rel (0) target = $region21
    $region20: #{tpu_custom_call.1} parent=1 // pred_region
      _
    $region21: #{tpu_custom_call.1} parent=1 // pred_fallthru
      _
    // Predicated region
    $region22: #{tpu_custom_call.1} parent=1 // pred_check
      _
    $region23: #{tpu_custom_call.1} parent=1 // pred_check_branch
      %24 = sbr.rel (0) target = $region25
    $region24: #{tpu_custom_call.1} parent=1 // pred_region
      _
    $region25: #{tpu_custom_call.1} parent=1 // pred_fallthru
      _
    // Predicated region
    $region26: #{tpu_custom_call.1} parent=1 // pred_check
      _
    $region27: #{tpu_custom_call.1} parent=1 // pred_check_branch
      %26 = sbr.rel (0) target = $region29
    $region28: #{tpu_custom_call.1} parent=1 // pred_region
      _
    $region29: #{tpu_custom_call.1} parent=1 // pred_fallthru
      _
    %v27 = vld [vmem:[%s0] sm:$0xff]
    %v28 = vld [vmem:[%s1] sm:$0xff]
    %v29 = vld [vmem:[%s1 + $0x8] sm:$0xff]
    %v30 = vld [vmem:[%s1 + $0x10] sm:$0xff]
    %v31 = vld [vmem:[%s1 + $0x18] sm:$0xff]
    %v32 = vld [vmem:[%s2] sm:$0x1]
    %v34 = vlaneseq
    %v35 = vshrl.u32 %v34, 7
    %v36 = vsub.s32 0, %v35
    %v37 = vrot.slane %v32, %v36
    %vm39 = vcmask 261120
    %v41 = vsel %vm39, %v27, 0
    %43 = vmatprep.subr.mxu0 0.0
    %44 = vmatpush1.msra.mxu0 %v28
    %45 = vmatprep.subr.mxu0 0.0
    %46 = vmatpush1.msra.mxu0 %v29
    %47 = vmatprep.subr.mxu0 0.0
    %48 = vmatpush1.msra.mxu0 %v30
    %49 = vmatprep.subr.mxu0 0.0
    %50 = vmatpush1.msra.mxu0 %v31
    %51 = vmatprep.subr.mxu0 0.0
    %52 = vmatpush1.msra.mxu0 0.0
    %53 = vmatprep.subr.mxu0 0.0
    %54 = vmatpush1.msra.mxu0 0.0
    %55 = vmatprep.subr.mxu0 0.0
    %56 = vmatpush1.msra.mxu0 0.0
    %57 = vmatprep.subr.mxu0 0.0
    %58 = vmatpush1.msra.mxu0 0.0
    %59 = vmatprep.subr.mxu0 0.0
    %60 = vmatpush1.msra.mxu0 0.0
    %61 = vmatprep.subr.mxu0 0.0
    %62 = vmatpush1.msra.mxu0 0.0
    %63 = vmatprep.subr.mxu0 0.0
    %64 = vmatpush1.msra.mxu0 0.0
    %65 = vmatprep.subr.mxu0 0.0
    %66 = vmatpush1.msra.mxu0 0.0
    %67 = vmatprep.subr.mxu0 0.0
    %68 = vmatpush1.msra.mxu0 0.0
    %69 = vmatprep.subr.mxu0 0.0
    %70 = vmatpush1.msra.mxu0 0.0
    %71 = vmatprep.subr.mxu0 0.0
    %72 = vmatpush1.msra.mxu0 0.0
    %73 = vmatprep.subr.mxu0 0.0
    %74 = vmatpush1.msra.mxu0 0.0
    %75 = vmatprep.subr.mxu0 0.0
    %76 = vmatpush1.msra.mxu0 0.0
    %77 = vmatprep.subr.mxu0 0.0
    %78 = vmatpush1.msra.mxu0 0.0
    %79 = vmatprep.subr.mxu0 0.0
    %80 = vmatpush1.msra.mxu0 0.0
    %81 = vmatprep.subr.mxu0 0.0
    %82 = vmatpush1.msra.mxu0 0.0
    %83 = vmatprep.subr.mxu0 0.0
    %84 = vmatpush1.msra.mxu0 0.0
    %85 = vmatprep.subr.mxu0 0.0
    %86 = vmatpush1.msra.mxu0 0.0
    %87 = vmatprep.subr.mxu0 0.0
    %88 = vmatpush1.msra.mxu0 0.0
    %89 = vmatprep.subr.mxu0 0.0
    %90 = vmatpush1.msra.mxu0 0.0
    %91 = vmatprep.subr.mxu0 0.0
    %92 = vmatpush1.msra.mxu0 0.0
    %93 = vmatprep.subr.mxu0 0.0
    %94 = vmatpush1.msra.mxu0 0.0
    %95 = vmatprep.subr.mxu0 0.0
    %96 = vmatpush1.msra.mxu0 0.0
    %97 = vmatprep.subr.mxu0 0.0
    %98 = vmatpush1.msra.mxu0 0.0
    %99 = vmatprep.subr.mxu0 0.0
    %100 = vmatpush1.msra.mxu0 0.0
    %101 = vmatprep.subr.mxu0 0.0
    %102 = vmatpush1.msra.mxu0 0.0
    %103 = vmatprep.subr.mxu0 0.0
    %104 = vmatpush1.msra.mxu0 0.0
    %105 = vmatprep.subr.mxu0 0.0
    %106 = vmatpush1.msra.mxu0 0.0
    %107 = vmatprep.mubr.f32.mxu0 0.0
    %108 = vmatmul.mubr.f32.gmra.mrb[0].mxu0 %v41
    %v109 = vpop.f32.mrb[0].mxu0
    %v110 = vadd.f32 %v37, %v109
    %v111 = vpop.f32.mrb[0].mxu0
    %112 = vdwg.mxu0
    %v113 = vmax.f32 %v110, 0.0
    %v114 = vld [vmem:[%s3] sm:$0xff]
    %v115 = vld [vmem:[%s3 + $0x8] sm:$0xff]
    %v116 = vld [vmem:[%s3 + $0x10] sm:$0xff]
    %v117 = vld [vmem:[%s3 + $0x18] sm:$0xff]
    %v118 = vld [vmem:[%s3 + $0x20] sm:$0xff]
    %v119 = vld [vmem:[%s3 + $0x28] sm:$0xff]
    %v120 = vld [vmem:[%s3 + $0x30] sm:$0xff]
    %v121 = vld [vmem:[%s3 + $0x38] sm:$0xff]
    %v122 = vld [vmem:[%s4] sm:$0x1]
    %v124 = vlaneseq
    %v125 = vshrl.u32 %v124, 7
    %v126 = vsub.s32 0, %v125
    %v127 = vrot.slane %v122, %v126
    %vm129 = vcmask 523264
    %v131 = vsel %vm129, %v113, 0
    %133 = vmatprep.subr.mxu0 0.0
    %134 = vmatpush1.msra.mxu0 %v114
    %135 = vmatprep.subr.mxu0 0.0
    %136 = vmatpush1.msra.mxu0 %v115
    %137 = vmatprep.subr.mxu0 0.0
    %138 = vmatpush1.msra.mxu0 %v116
    %139 = vmatprep.subr.mxu0 0.0
    %140 = vmatpush1.msra.mxu0 %v117
    %141 = vmatprep.subr.mxu0 0.0
    %142 = vmatpush1.msra.mxu0 %v118
    %143 = vmatprep.subr.mxu0 0.0
    %144 = vmatpush1.msra.mxu0 %v119
    %145 = vmatprep.subr.mxu0 0.0
    %146 = vmatpush1.msra.mxu0 %v120
    %147 = vmatprep.subr.mxu0 0.0
    %148 = vmatpush1.msra.mxu0 %v121
    %149 = vmatprep.subr.mxu0 0.0
    %150 = vmatpush1.msra.mxu0 0.0
    %151 = vmatprep.subr.mxu0 0.0
    %152 = vmatpush1.msra.mxu0 0.0
    %153 = vmatprep.subr.mxu0 0.0
    %154 = vmatpush1.msra.mxu0 0.0
    %155 = vmatprep.subr.mxu0 0.0
    %156 = vmatpush1.msra.mxu0 0.0
    %157 = vmatprep.subr.mxu0 0.0
    %158 = vmatpush1.msra.mxu0 0.0
    %159 = vmatprep.subr.mxu0 0.0
    %160 = vmatpush1.msra.mxu0 0.0
    %161 = vmatprep.subr.mxu0 0.0
    %162 = vmatpush1.msra.mxu0 0.0
    %163 = vmatprep.subr.mxu0 0.0
    %164 = vmatpush1.msra.mxu0 0.0
    %165 = vmatprep.subr.mxu0 0.0
    %166 = vmatpush1.msra.mxu0 0.0
    %167 = vmatprep.subr.mxu0 0.0
    %168 = vmatpush1.msra.mxu0 0.0
    %169 = vmatprep.subr.mxu0 0.0
    %170 = vmatpush1.msra.mxu0 0.0
    %171 = vmatprep.subr.mxu0 0.0
    %172 = vmatpush1.msra.mxu0 0.0
    %173 = vmatprep.subr.mxu0 0.0
    %174 = vmatpush1.msra.mxu0 0.0
    %175 = vmatprep.subr.mxu0 0.0
    %176 = vmatpush1.msra.mxu0 0.0
    %177 = vmatprep.subr.mxu0 0.0
    %178 = vmatpush1.msra.mxu0 0.0
    %179 = vmatprep.subr.mxu0 0.0
    %180 = vmatpush1.msra.mxu0 0.0
    %181 = vmatprep.subr.mxu0 0.0
    %182 = vmatpush1.msra.mxu0 0.0
    %183 = vmatprep.subr.mxu0 0.0
    %184 = vmatpush1.msra.mxu0 0.0
    %185 = vmatprep.subr.mxu0 0.0
    %186 = vmatpush1.msra.mxu0 0.0
    %187 = vmatprep.subr.mxu0 0.0
    %188 = vmatpush1.msra.mxu0 0.0
    %189 = vmatprep.subr.mxu0 0.0
    %190 = vmatpush1.msra.mxu0 0.0
    %191 = vmatprep.subr.mxu0 0.0
    %192 = vmatpush1.msra.mxu0 0.0
    %193 = vmatprep.subr.mxu0 0.0
    %194 = vmatpush1.msra.mxu0 0.0
    %195 = vmatprep.subr.mxu0 0.0
    %196 = vmatpush1.msra.mxu0 0.0
    %197 = vmatprep.mubr.f32.mxu0 0.0
    %198 = vmatmul.mubr.f32.gmra.mrb[0].mxu0 %v131
    %v199 = vpop.f32.mrb[0].mxu0
    %v200 = vadd.f32 %v127, %v199
    %v201 = vpop.f32.mrb[0].mxu0
    %202 = vdwg.mxu0
    %v203 = vmax.f32 %v200, 0.0
    %v204 = vld [vmem:[%s5] sm:$0xff]
    %v205 = vld [vmem:[%s5 + $0x8] sm:$0xff]
    %v206 = vld [vmem:[%s5 + $0x10] sm:$0xff]
    %v207 = vld [vmem:[%s5 + $0x18] sm:$0xff]
    %v208 = vld [vmem:[%s6] sm:$0x1]
    %v210 = vlaneseq
    %v211 = vshrl.u32 %v210, 7
    %v212 = vsub.s32 0, %v211
    %v213 = vrot.slane %v208, %v212
    %v216 = vsel %vm39, %v203, 0
    %218 = vmatprep.subr.mxu0 0.0
    %219 = vmatpush1.msra.mxu0 %v204
    %220 = vmatprep.subr.mxu0 0.0
    %221 = vmatpush1.msra.mxu0 %v205
    %222 = vmatprep.subr.mxu0 0.0
    %223 = vmatpush1.msra.mxu0 %v206
    %224 = vmatprep.subr.mxu0 0.0
    %225 = vmatpush1.msra.mxu0 %v207
    %226 = vmatprep.subr.mxu0 0.0
    %227 = vmatpush1.msra.mxu0 0.0
    %228 = vmatprep.subr.mxu0 0.0
    %229 = vmatpush1.msra.mxu0 0.0
    %230 = vmatprep.subr.mxu0 0.0
    %231 = vmatpush1.msra.mxu0 0.0
    %232 = vmatprep.subr.mxu0 0.0
    %233 = vmatpush1.msra.mxu0 0.0
    %234 = vmatprep.subr.mxu0 0.0
    %235 = vmatpush1.msra.mxu0 0.0
    %236 = vmatprep.subr.mxu0 0.0
    %237 = vmatpush1.msra.mxu0 0.0
    %238 = vmatprep.subr.mxu0 0.0
    %239 = vmatpush1.msra.mxu0 0.0
    %240 = vmatprep.subr.mxu0 0.0
    %241 = vmatpush1.msra.mxu0 0.0
    %242 = vmatprep.subr.mxu0 0.0
    %243 = vmatpush1.msra.mxu0 0.0
    %244 = vmatprep.subr.mxu0 0.0
    %245 = vmatpush1.msra.mxu0 0.0
    %246 = vmatprep.subr.mxu0 0.0
    %247 = vmatpush1.msra.mxu0 0.0
    %248 = vmatprep.subr.mxu0 0.0
    %249 = vmatpush1.msra.mxu0 0.0
    %250 = vmatprep.subr.mxu0 0.0
    %251 = vmatpush1.msra.mxu0 0.0
    %252 = vmatprep.subr.mxu0 0.0
    %253 = vmatpush1.msra.mxu0 0.0
    %254 = vmatprep.subr.mxu0 0.0
    %255 = vmatpush1.msra.mxu0 0.0
    %256 = vmatprep.subr.mxu0 0.0
    %257 = vmatpush1.msra.mxu0 0.0
    %258 = vmatprep.subr.mxu0 0.0
    %259 = vmatpush1.msra.mxu0 0.0
    %260 = vmatprep.subr.mxu0 0.0
    %261 = vmatpush1.msra.mxu0 0.0
    %262 = vmatprep.subr.mxu0 0.0
    %263 = vmatpush1.msra.mxu0 0.0
    %264 = vmatprep.subr.mxu0 0.0
    %265 = vmatpush1.msra.mxu0 0.0
    %266 = vmatprep.subr.mxu0 0.0
    %267 = vmatpush1.msra.mxu0 0.0
    %268 = vmatprep.subr.mxu0 0.0
    %269 = vmatpush1.msra.mxu0 0.0
    %270 = vmatprep.subr.mxu0 0.0
    %271 = vmatpush1.msra.mxu0 0.0
    %272 = vmatprep.subr.mxu0 0.0
    %273 = vmatpush1.msra.mxu0 0.0
    %274 = vmatprep.subr.mxu0 0.0
    %275 = vmatpush1.msra.mxu0 0.0
    %276 = vmatprep.subr.mxu0 0.0
    %277 = vmatpush1.msra.mxu0 0.0
    %278 = vmatprep.subr.mxu0 0.0
    %279 = vmatpush1.msra.mxu0 0.0
    %280 = vmatprep.subr.mxu0 0.0
    %281 = vmatpush1.msra.mxu0 0.0
    %282 = vmatprep.mubr.f32.mxu0 0.0
    %283 = vmatmul.mubr.f32.gmra.mrb[0].mxu0 %v216
    %v284 = vpop.f32.mrb[0].mxu0
    %v285 = vadd.f32 %v213, %v284
    %v286 = vpop.f32.mrb[0].mxu0
    %287 = vdwg.mxu0
    %288 = vst [vmem:[#allocation2] sm:$0xff] %v285
    // Predicated region
    $region30: #{tpu_custom_call.1} parent=1 // pred_check
      _
    $region31: #{tpu_custom_call.1} parent=1 // pred_check_branch
      %290 = sbr.rel (0) target = $region33
    $region32: #{tpu_custom_call.1} parent=1 // pred_region
      %s292 = ssub.s32 128, 128
      %293 = vsyncadd [#allocation3], %s292
      %s295 = sshll.u32 [#allocation2], 4
      %s296 = int_to_ptr.vmem [resolvable:$true] %s295
      %298 = dma.vmem_to_hbm [thread:$0]  %s296, 128, %s7, [#allocation3]
    $region33: #{tpu_custom_call.1} parent=1 // pred_fallthru
      _
    // Predicated region
    $region34: #{tpu_custom_call.1} parent=1 // pred_check
      _
    $region35: #{tpu_custom_call.1} parent=1 // pred_check_branch
      %300 = sbr.rel (0) target = $region37
    $region36: #{tpu_custom_call.1} parent=1 // pred_region
      %301 = dma.done [#allocation3], 128
    $region37: #{tpu_custom_call.1} parent=1 // pred_fallthru
      _
    %302 = vsyncpa [#allocation3], 1

</llo_original>
